<compile_context>
chip_gen: v5e
topology: v5e:2x2
jax: 0.10.0
libtpu: 0.0.40
codegen_flags: <defaults>
</compile_context>

<pallas_src>
import functools

import jax
import jax.numpy as jnp
from jax.experimental import pallas as pl
from jax.experimental.pallas import tpu as pltpu

N_LATENT = 4      # the "N" of CANM(N)
_SLAB_COLS = 32   # >= max fused fan_in (24) + 1 bias column
_ROW_ALIGN = 16   # bf16 packs 16 rows / vreg -> keep every slab block 16-row aligned


def _round_up(x, m):
    return (x + m - 1) // m * m


def _block_diag(a, b):
    ra, ca = a.shape
    rb, cb = b.shape
    top = jnp.concatenate([a, jnp.zeros((ra, cb), a.dtype)], axis=1)
    bot = jnp.concatenate([jnp.zeros((rb, ca), b.dtype), b], axis=1)
    return jnp.concatenate([top, bot], axis=0)


# --------------------------------------------------------------------------
# Kernel
# --------------------------------------------------------------------------
def canm_kernel(layout, n_latent, in_ref, w_ref, out_ref):
    """Batch-on-lanes forward: every activation is (features, TILE_B)."""
    f32 = jnp.float32
    relu = lambda v: jnp.maximum(v, 0.0)

    def dot(a, b):
        # bf16 operands on the MXU, f32 accumulation.
        return jnp.dot(a.astype(jnp.bfloat16), b.astype(jnp.bfloat16),
                       preferred_element_type=f32)

    def wb(name):
        r, out, inn = layout[name]                 # static Python ints
        return w_ref[r:r + out, 0:inn], w_ref[r:r + out, inn:inn + 1]

    inp = in_ref[...]                              # (2+N, TB) f32
    x = inp[0:1, :]                                # (1, TB) == data[:, 0].view(-1, 1)
    y = inp[1:2, :]                                # (1, TB)
    eps = inp[2:2 + n_latent, :]                   # (N, TB)

    # ---- fc1 (K=2): VPU broadcast-MACs, keeps the MXU-push slot free ----
    W1, b1 = wb("fc1")
    W1f = W1.astype(f32)
    h1 = relu(W1f[:, 0:1] * x + W1f[:, 1:2] * y + b1.astype(f32))     # (20, TB)

    # ---- encoder (mu / logvar branches fused into shared matmuls) ----
    WA, bA = wb("encA")                            # fc21 | fc31 stacked
    hA = relu(dot(WA, h1) + bA.astype(f32))        # (24, TB) = [h21 ; h31]

    WB, bB = wb("encB")                            # fc22 (+) fc32 block-diagonal
    hB = relu(dot(WB, hA) + bB.astype(f32))        # (14, TB) = [h22 ; h32]

    WC, bC = wb("encC")                            # fc23 (+) fc33 block-diagonal
    mlv = dot(WC, hB) + bC.astype(f32)             # (2N, TB) = [mu ; logvar]
    mu = mlv[0:n_latent, :]
    logvar = mlv[n_latent:, :]

    # ---- reparameterize (training mode), all f32 on the VPU/EUP ----
    z = eps * jnp.exp(0.5 * logvar) + mu           # (N, TB)

    # ---- fc4(cat(x, z)), K = 1+N: VPU broadcast-MACs (no concatenate) ----
    r4, o4, i4 = layout["fc4"]
    W4 = w_ref[r4:r4 + o4, 0:i4].astype(f32)       # (10, 1+N)
    b4 = w_ref[r4:r4 + o4, i4:i4 + 1].astype(f32)  # (10, 1)
    acc4 = W4[:, 0:1] * x + b4
    for j in range(n_latent):                      # unrolled, static
        acc4 = acc4 + W4[:, j + 1:j + 2] * z[j:j + 1, :]
    h4 = relu(acc4)                                # (10, TB)

    W5, b5 = wb("fc5")
    h5 = relu(dot(W5, h4) + b5.astype(f32))        # (7, TB)
    W6, b6 = wb("fc6")
    h6 = relu(dot(W6, h5) + b6.astype(f32))        # (5, TB)
    W7, b7 = wb("fc7")
    yhat = dot(W7, h6) + b7.astype(f32)            # (1, TB)

    # ---- lane-dense output slab: rows = [mu ; logvar ; yhat] ----
    # mlv fills rows 0:2N (one aligned 8-row sublane tile for N=4) -> unmasked vst.
    out_ref[0:2 * n_latent, :] = mlv
    out_ref[2 * n_latent:2 * n_latent + 1, :] = yhat


# --------------------------------------------------------------------------
# Parameter handling
# --------------------------------------------------------------------------
def linear_params(key, fan_in, fan_out):
    """PyTorch nn.Linear default init, W stored in torch layout (out, in)."""
    kw, kb = jax.random.split(key)
    bound = 1.0 / jnp.sqrt(jnp.float32(fan_in))
    W = jax.random.uniform(kw, (fan_out, fan_in), jnp.float32, -bound, bound)
    b = jax.random.uniform(kb, (fan_out,), jnp.float32, -bound, bound)
    return W, b


def init_canm_params(key, n_latent):
    keys = jax.random.split(key, 11)
    p = {}
    p["fc1"] = linear_params(keys[0], 2, 20)
    p["fc21"] = linear_params(keys[1], 20, 12)
    p["fc22"] = linear_params(keys[2], 12, 7)
    p["fc23"] = linear_params(keys[3], 7, n_latent)
    p["fc31"] = linear_params(keys[4], 20, 12)
    p["fc32"] = linear_params(keys[5], 12, 7)
    p["fc33"] = linear_params(keys[6], 7, n_latent)
    p["fc4"] = linear_params(keys[7], 1 + n_latent, 10)
    p["fc5"] = linear_params(keys[8], 10, 7)
    p["fc6"] = linear_params(keys[9], 7, 5)
    p["fc7"] = linear_params(keys[10], 5, 1)
    return p


def pack_weight_slab(params, n_latent):
    """Pack all (fused) layer weights + biases into one bf16 slab.

    Each layer occupies a 16-row-aligned block (bf16 sublane packing): W (out, in)
    at columns [0, in), its bias at column `in`.  Returns (slab, layout) with
    layout[name] = (row_start, out_features, in_features).
    """
    W21, b21 = params["fc21"]
    W31, b31 = params["fc31"]
    W22, b22 = params["fc22"]
    W32, b32 = params["fc32"]
    W23, b23 = params["fc23"]
    W33, b33 = params["fc33"]

    fused = {
        "fc1": params["fc1"],
        "encA": (jnp.concatenate([W21, W31], axis=0),
                 jnp.concatenate([b21, b31], axis=0)),
        "encB": (_block_diag(W22, W32), jnp.concatenate([b22, b32], axis=0)),
        "encC": (_block_diag(W23, W33), jnp.concatenate([b23, b33], axis=0)),
        "fc4": params["fc4"],
        "fc5": params["fc5"],
        "fc6": params["fc6"],
        "fc7": params["fc7"],
    }

    layout = {}
    blocks = []
    row = 0
    for name, (W, b) in fused.items():
        out, inn = W.shape
        blk_rows = _round_up(out, _ROW_ALIGN)
        blk = jnp.zeros((blk_rows, _SLAB_COLS), jnp.float32)
        blk = blk.at[:out, :inn].set(W.astype(jnp.float32))
        blk = blk.at[:out, inn].set(b.astype(jnp.float32))
        blocks.append(blk)
        layout[name] = (row, out, inn)
        row += blk_rows
    slab = jnp.concatenate(blocks, axis=0).astype(jnp.bfloat16)   # (160, 32) for N=4
    return slab, layout


# --------------------------------------------------------------------------
# Wrapper
# --------------------------------------------------------------------------
def canm_forward(data, eps, params, n_latent=N_LATENT, max_tile_b=8192):
    data = data.reshape(-1, 2).astype(jnp.float32)
    B = data.shape[0]
    eps = eps.reshape(B, n_latent).astype(jnp.float32)

    # Balanced batch tiles:
    #  * cap tile_b at 8192 (keeps f32 intermediates + double-buffered I/O well
    #    under the 32 MiB scoped VMEM limit, v7x-safe; bigger tiles buy nothing
    #    because the kernel is MXU-streaming-bound, not HBM-bound),
    #  * at least 2 grid steps when B allows so v7x's two TensorCores both work,
    #  * tiles sized evenly so batch-padding waste is bounded (~<=128/tile).
    n_tiles = pl.cdiv(B, max_tile_b)
    if B > 128:
        n_tiles = max(n_tiles, 2)
    tile_b = _round_up(pl.cdiv(B, n_tiles), 128)
    B_pad = tile_b * n_tiles

    # Single fused input slab, batch-on-lanes: rows = [x ; y ; eps_0..eps_{N-1}].
    inp = jnp.concatenate([data, eps], axis=1).T            # (2+N, B)
    inp = jnp.pad(inp, ((0, 0), (0, B_pad - B)))            # (2+N, B_pad)

    slab, layout = pack_weight_slab(params, n_latent)
    n_out = 1 + 2 * n_latent
    grid = (n_tiles,)

    out = pl.pallas_call(
        functools.partial(canm_kernel, layout, n_latent),
        out_shape=jax.ShapeDtypeStruct((n_out, B_pad), jnp.float32),
        grid=grid,
        in_specs=[
            pl.BlockSpec((2 + n_latent, tile_b), lambda i: (0, i)),  # [x;y;eps] tile
            # Constant index_map -> the tiny bf16 weight slab stays VMEM-resident
            # across all grid steps (single DMA).
            pl.BlockSpec(slab.shape, lambda i: (0, 0)),
        ],
        out_specs=pl.BlockSpec((n_out, tile_b), lambda i: (0, i)),
        compiler_params=pltpu.CompilerParams(
            dimension_semantics=("parallel",),
        ),
    )(inp, slab)

    # One transpose of the valid slab, then plain column slices.
    out_t = out[:, :B].T                              # (B, 2N+1)
    mu = out_t[:, 0:n_latent]                         # (B, N)
    logvar = out_t[:, n_latent:2 * n_latent]          # (B, N)
    yhat = out_t[:, 2 * n_latent:2 * n_latent + 1]    # (B, 1)
    return yhat, mu, logvar


def canm_forward_ref(data, eps, params, n_latent=N_LATENT):
    """Pure-JAX f32 reference mirroring the PyTorch forward (training mode)."""
    data = data.reshape(-1, 2).astype(jnp.float32)
    x = data[:, 0:1]
    relu = lambda v: jnp.maximum(v, 0.0)
    lin = lambda h, wb: h @ wb[0].T + wb[1]

    h1 = relu(lin(data, params["fc1"]))
    h21 = relu(lin(h1, params["fc21"]))
    h22 = relu(lin(h21, params["fc22"]))
    mu = lin(h22, params["fc23"])
    h31 = relu(lin(h1, params["fc31"]))
    h32 = relu(lin(h31, params["fc32"]))
    logvar = lin(h32, params["fc33"])
    z = eps * jnp.exp(0.5 * logvar) + mu
    h4 = relu(jnp.concatenate([x, z], axis=1) @ params["fc4"][0].T + params["fc4"][1])
    h5 = relu(lin(h4, params["fc5"]))
    h6 = relu(lin(h5, params["fc6"]))
    yhat = lin(h6, params["fc7"])
    return yhat, mu, logvar


if __name__ == "__main__":
    key = jax.random.PRNGKey(0)
    k_param, k_data, k_eps = jax.random.split(key, 3)

    B = 64
    params = init_canm_params(k_param, N_LATENT)
    data = jax.random.normal(k_data, (B, 2), jnp.float32)
    eps = jax.random.normal(k_eps, (B, N_LATENT), jnp.float32)

    yhat, mu, logvar = canm_forward(data, eps, params)
    jax.block_until_ready((yhat, mu, logvar))

    # bf16 MXU operands vs the pure-f32 reference -> looser tolerance (per review).
    yhat_r, mu_r, logvar_r = canm_forward_ref(data, eps, params)
    assert yhat.shape == (B, 1) and mu.shape == (B, N_LATENT) and logvar.shape == (B, N_LATENT)
    assert jnp.allclose(yhat, yhat_r, atol=5e-2, rtol=5e-2)
    assert jnp.allclose(mu, mu_r, atol=5e-2, rtol=5e-2)
    assert jnp.allclose(logvar, logvar_r, atol=5e-2, rtol=5e-2)

    print("KERNEL_OK")
</pallas_src>

<mosaic_0001>
module attributes {stable_mosaic.version = 11 : i64} {
  func.func @canm_kernel(%arg0: i32, %arg1: memref<6x128xf32, #tpu.memory_space<vmem>>, %arg2: memref<160x32xbf16, #tpu.memory_space<vmem>>, %arg3: memref<9x128xf32, #tpu.memory_space<vmem>>) attributes {dimension_semantics = [#tpu.dimension_semantics<parallel>], iteration_bounds = array<i64: 1>, scalar_prefetch = 0 : i64, scratch_operands = 0 : i64, tpu.core_type = #tpu.core_type<tc>, window_params = [{transform_indices = @transform_0, window_bounds = array<i64: 6, 128>}, {pipeline_mode = #tpu.pipeline_mode<synchronous>, transform_indices = @transform_1, window_bounds = array<i64: 160, 32>}, {transform_indices = @transform_2, window_bounds = array<i64: 9, 128>}]} {
    %c0 = arith.constant 0 : index
    %c0_0 = arith.constant 0 : index
    %0 = vector.load %arg1[%c0, %c0_0] : memref<6x128xf32, #tpu.memory_space<vmem>>, vector<6x128xf32>
    %1 = vector.extract_strided_slice %0 {offsets = [0, 0], sizes = [1, 128], strides = [1, 1]} : vector<6x128xf32> to vector<1x128xf32>
    %2 = vector.extract_strided_slice %0 {offsets = [1, 0], sizes = [1, 128], strides = [1, 1]} : vector<6x128xf32> to vector<1x128xf32>
    %3 = vector.extract_strided_slice %0 {offsets = [2, 0], sizes = [4, 128], strides = [1, 1]} : vector<6x128xf32> to vector<4x128xf32>
    %c0_1 = arith.constant 0 : index
    %c0_2 = arith.constant 0 : index
    %4 = vector.load %arg2[%c0_1, %c0_2] : memref<160x32xbf16, #tpu.memory_space<vmem>>, vector<20x2xbf16>
    %c0_3 = arith.constant 0 : index
    %c2 = arith.constant 2 : index
    %5 = vector.load %arg2[%c0_3, %c2] : memref<160x32xbf16, #tpu.memory_space<vmem>>, vector<20x1xbf16>
    %6 = arith.extf %4 : vector<20x2xbf16> to vector<20x2xf32>
    %7 = vector.extract_strided_slice %6 {offsets = [0, 0], sizes = [20, 1], strides = [1, 1]} : vector<20x2xf32> to vector<20x1xf32>
    %8 = vector.broadcast %7 : vector<20x1xf32> to vector<20x128xf32>
    %9 = vector.broadcast %1 : vector<1x128xf32> to vector<20x128xf32>
    %10 = arith.mulf %8, %9 : vector<20x128xf32>
    %11 = vector.extract_strided_slice %6 {offsets = [0, 1], sizes = [20, 1], strides = [1, 1]} : vector<20x2xf32> to vector<20x1xf32>
    %12 = vector.broadcast %11 : vector<20x1xf32> to vector<20x128xf32>
    %13 = vector.broadcast %2 : vector<1x128xf32> to vector<20x128xf32>
    %14 = arith.mulf %12, %13 : vector<20x128xf32>
    %15 = arith.addf %10, %14 : vector<20x128xf32>
    %16 = arith.extf %5 : vector<20x1xbf16> to vector<20x1xf32>
    %17 = vector.broadcast %16 : vector<20x1xf32> to vector<20x128xf32>
    %18 = arith.addf %15, %17 : vector<20x128xf32>
    %cst = arith.constant 0.000000e+00 : f32
    %19 = vector.broadcast %cst : f32 to vector<20x128xf32>
    %20 = arith.maximumf %18, %19 : vector<20x128xf32>
    %c32 = arith.constant 32 : index
    %c0_4 = arith.constant 0 : index
    %21 = vector.load %arg2[%c32, %c0_4] : memref<160x32xbf16, #tpu.memory_space<vmem>>, vector<24x20xbf16>
    %c32_5 = arith.constant 32 : index
    %c20 = arith.constant 20 : index
    %22 = vector.load %arg2[%c32_5, %c20] : memref<160x32xbf16, #tpu.memory_space<vmem>>, vector<24x1xbf16>
    %23 = arith.truncf %20 : vector<20x128xf32> to vector<20x128xbf16>
    %cst_6 = arith.constant dense<0.000000e+00> : vector<24x128xf32>
    %24 = tpu.matmul %21, %23, %cst_6 {dimension_numbers = #tpu.dot_dimension_numbers<[1], [0], [0], [1], [0, 0, 1, 1], [], []>} : vector<24x20xbf16>, vector<20x128xbf16>, vector<24x128xf32> -> vector<24x128xf32>
    %25 = arith.extf %22 : vector<24x1xbf16> to vector<24x1xf32>
    %26 = vector.broadcast %25 : vector<24x1xf32> to vector<24x128xf32>
    %27 = arith.addf %24, %26 : vector<24x128xf32>
    %cst_7 = arith.constant 0.000000e+00 : f32
    %28 = vector.broadcast %cst_7 : f32 to vector<24x128xf32>
    %29 = arith.maximumf %27, %28 : vector<24x128xf32>
    %c64 = arith.constant 64 : index
    %c0_8 = arith.constant 0 : index
    %30 = vector.load %arg2[%c64, %c0_8] : memref<160x32xbf16, #tpu.memory_space<vmem>>, vector<14x24xbf16>
    %c64_9 = arith.constant 64 : index
    %c24 = arith.constant 24 : index
    %31 = vector.load %arg2[%c64_9, %c24] : memref<160x32xbf16, #tpu.memory_space<vmem>>, vector<14x1xbf16>
    %32 = arith.truncf %29 : vector<24x128xf32> to vector<24x128xbf16>
    %cst_10 = arith.constant dense<0.000000e+00> : vector<14x128xf32>
    %33 = tpu.matmul %30, %32, %cst_10 {dimension_numbers = #tpu.dot_dimension_numbers<[1], [0], [0], [1], [0, 0, 1, 1], [], []>} : vector<14x24xbf16>, vector<24x128xbf16>, vector<14x128xf32> -> vector<14x128xf32>
    %34 = arith.extf %31 : vector<14x1xbf16> to vector<14x1xf32>
    %35 = vector.broadcast %34 : vector<14x1xf32> to vector<14x128xf32>
    %36 = arith.addf %33, %35 : vector<14x128xf32>
    %cst_11 = arith.constant 0.000000e+00 : f32
    %37 = vector.broadcast %cst_11 : f32 to vector<14x128xf32>
    %38 = arith.maximumf %36, %37 : vector<14x128xf32>
    %c80 = arith.constant 80 : index
    %c0_12 = arith.constant 0 : index
    %39 = vector.load %arg2[%c80, %c0_12] : memref<160x32xbf16, #tpu.memory_space<vmem>>, vector<8x14xbf16>
    %c80_13 = arith.constant 80 : index
    %c14 = arith.constant 14 : index
    %40 = vector.load %arg2[%c80_13, %c14] : memref<160x32xbf16, #tpu.memory_space<vmem>>, vector<8x1xbf16>
    %41 = arith.truncf %38 : vector<14x128xf32> to vector<14x128xbf16>
    %cst_14 = arith.constant dense<0.000000e+00> : vector<8x128xf32>
    %42 = tpu.matmul %39, %41, %cst_14 {dimension_numbers = #tpu.dot_dimension_numbers<[1], [0], [0], [1], [0, 0, 1, 1], [], []>} : vector<8x14xbf16>, vector<14x128xbf16>, vector<8x128xf32> -> vector<8x128xf32>
    %43 = arith.extf %40 : vector<8x1xbf16> to vector<8x1xf32>
    %44 = vector.broadcast %43 : vector<8x1xf32> to vector<8x128xf32>
    %45 = arith.addf %42, %44 : vector<8x128xf32>
    %46 = vector.extract_strided_slice %45 {offsets = [0, 0], sizes = [4, 128], strides = [1, 1]} : vector<8x128xf32> to vector<4x128xf32>
    %47 = vector.extract_strided_slice %45 {offsets = [4, 0], sizes = [4, 128], strides = [1, 1]} : vector<8x128xf32> to vector<4x128xf32>
    %cst_15 = arith.constant 5.000000e-01 : f32
    %48 = vector.broadcast %cst_15 : f32 to vector<4x128xf32>
    %49 = arith.mulf %48, %47 : vector<4x128xf32>
    %50 = math.exp %49 : vector<4x128xf32>
    %51 = arith.mulf %3, %50 : vector<4x128xf32>
    %52 = arith.addf %51, %46 : vector<4x128xf32>
    %c96 = arith.constant 96 : index
    %c0_16 = arith.constant 0 : index
    %53 = vector.load %arg2[%c96, %c0_16] : memref<160x32xbf16, #tpu.memory_space<vmem>>, vector<10x5xbf16>
    %54 = arith.extf %53 : vector<10x5xbf16> to vector<10x5xf32>
    %c96_17 = arith.constant 96 : index
    %c5 = arith.constant 5 : index
    %55 = vector.load %arg2[%c96_17, %c5] : memref<160x32xbf16, #tpu.memory_space<vmem>>, vector<10x1xbf16>
    %56 = arith.extf %55 : vector<10x1xbf16> to vector<10x1xf32>
    %57 = vector.extract_strided_slice %54 {offsets = [0, 0], sizes = [10, 1], strides = [1, 1]} : vector<10x5xf32> to vector<10x1xf32>
    %58 = vector.broadcast %57 : vector<10x1xf32> to vector<10x128xf32>
    %59 = vector.broadcast %1 : vector<1x128xf32> to vector<10x128xf32>
    %60 = arith.mulf %58, %59 : vector<10x128xf32>
    %61 = vector.broadcast %56 : vector<10x1xf32> to vector<10x128xf32>
    %62 = arith.addf %60, %61 : vector<10x128xf32>
    %63 = vector.extract_strided_slice %54 {offsets = [0, 1], sizes = [10, 1], strides = [1, 1]} : vector<10x5xf32> to vector<10x1xf32>
    %64 = vector.extract_strided_slice %52 {offsets = [0, 0], sizes = [1, 128], strides = [1, 1]} : vector<4x128xf32> to vector<1x128xf32>
    %65 = vector.broadcast %63 : vector<10x1xf32> to vector<10x128xf32>
    %66 = vector.broadcast %64 : vector<1x128xf32> to vector<10x128xf32>
    %67 = arith.mulf %65, %66 : vector<10x128xf32>
    %68 = arith.addf %62, %67 : vector<10x128xf32>
    %69 = vector.extract_strided_slice %54 {offsets = [0, 2], sizes = [10, 1], strides = [1, 1]} : vector<10x5xf32> to vector<10x1xf32>
    %70 = vector.extract_strided_slice %52 {offsets = [1, 0], sizes = [1, 128], strides = [1, 1]} : vector<4x128xf32> to vector<1x128xf32>
    %71 = vector.broadcast %69 : vector<10x1xf32> to vector<10x128xf32>
    %72 = vector.broadcast %70 : vector<1x128xf32> to vector<10x128xf32>
    %73 = arith.mulf %71, %72 : vector<10x128xf32>
    %74 = arith.addf %68, %73 : vector<10x128xf32>
    %75 = vector.extract_strided_slice %54 {offsets = [0, 3], sizes = [10, 1], strides = [1, 1]} : vector<10x5xf32> to vector<10x1xf32>
    %76 = vector.extract_strided_slice %52 {offsets = [2, 0], sizes = [1, 128], strides = [1, 1]} : vector<4x128xf32> to vector<1x128xf32>
    %77 = vector.broadcast %75 : vector<10x1xf32> to vector<10x128xf32>
    %78 = vector.broadcast %76 : vector<1x128xf32> to vector<10x128xf32>
    %79 = arith.mulf %77, %78 : vector<10x128xf32>
    %80 = arith.addf %74, %79 : vector<10x128xf32>
    %81 = vector.extract_strided_slice %54 {offsets = [0, 4], sizes = [10, 1], strides = [1, 1]} : vector<10x5xf32> to vector<10x1xf32>
    %82 = vector.extract_strided_slice %52 {offsets = [3, 0], sizes = [1, 128], strides = [1, 1]} : vector<4x128xf32> to vector<1x128xf32>
    %83 = vector.broadcast %81 : vector<10x1xf32> to vector<10x128xf32>
    %84 = vector.broadcast %82 : vector<1x128xf32> to vector<10x128xf32>
    %85 = arith.mulf %83, %84 : vector<10x128xf32>
    %86 = arith.addf %80, %85 : vector<10x128xf32>
    %cst_18 = arith.constant 0.000000e+00 : f32
    %87 = vector.broadcast %cst_18 : f32 to vector<10x128xf32>
    %88 = arith.maximumf %86, %87 : vector<10x128xf32>
    %c112 = arith.constant 112 : index
    %c0_19 = arith.constant 0 : index
    %89 = vector.load %arg2[%c112, %c0_19] : memref<160x32xbf16, #tpu.memory_space<vmem>>, vector<7x10xbf16>
    %c112_20 = arith.constant 112 : index
    %c10 = arith.constant 10 : index
    %90 = vector.load %arg2[%c112_20, %c10] : memref<160x32xbf16, #tpu.memory_space<vmem>>, vector<7x1xbf16>
    %91 = arith.truncf %88 : vector<10x128xf32> to vector<10x128xbf16>
    %cst_21 = arith.constant dense<0.000000e+00> : vector<7x128xf32>
    %92 = tpu.matmul %89, %91, %cst_21 {dimension_numbers = #tpu.dot_dimension_numbers<[1], [0], [0], [1], [0, 0, 1, 1], [], []>} : vector<7x10xbf16>, vector<10x128xbf16>, vector<7x128xf32> -> vector<7x128xf32>
    %93 = arith.extf %90 : vector<7x1xbf16> to vector<7x1xf32>
    %94 = vector.broadcast %93 : vector<7x1xf32> to vector<7x128xf32>
    %95 = arith.addf %92, %94 : vector<7x128xf32>
    %cst_22 = arith.constant 0.000000e+00 : f32
    %96 = vector.broadcast %cst_22 : f32 to vector<7x128xf32>
    %97 = arith.maximumf %95, %96 : vector<7x128xf32>
    %c128 = arith.constant 128 : index
    %c0_23 = arith.constant 0 : index
    %98 = vector.load %arg2[%c128, %c0_23] : memref<160x32xbf16, #tpu.memory_space<vmem>>, vector<5x7xbf16>
    %c128_24 = arith.constant 128 : index
    %c7 = arith.constant 7 : index
    %99 = vector.load %arg2[%c128_24, %c7] : memref<160x32xbf16, #tpu.memory_space<vmem>>, vector<5x1xbf16>
    %100 = arith.truncf %97 : vector<7x128xf32> to vector<7x128xbf16>
    %cst_25 = arith.constant dense<0.000000e+00> : vector<5x128xf32>
    %101 = tpu.matmul %98, %100, %cst_25 {dimension_numbers = #tpu.dot_dimension_numbers<[1], [0], [0], [1], [0, 0, 1, 1], [], []>} : vector<5x7xbf16>, vector<7x128xbf16>, vector<5x128xf32> -> vector<5x128xf32>
    %102 = arith.extf %99 : vector<5x1xbf16> to vector<5x1xf32>
    %103 = vector.broadcast %102 : vector<5x1xf32> to vector<5x128xf32>
    %104 = arith.addf %101, %103 : vector<5x128xf32>
    %cst_26 = arith.constant 0.000000e+00 : f32
    %105 = vector.broadcast %cst_26 : f32 to vector<5x128xf32>
    %106 = arith.maximumf %104, %105 : vector<5x128xf32>
    %c144 = arith.constant 144 : index
    %c0_27 = arith.constant 0 : index
    %107 = vector.load %arg2[%c144, %c0_27] : memref<160x32xbf16, #tpu.memory_space<vmem>>, vector<1x5xbf16>
    %c144_28 = arith.constant 144 : index
    %c5_29 = arith.constant 5 : index
    %108 = vector.load %arg2[%c144_28, %c5_29] : memref<160x32xbf16, #tpu.memory_space<vmem>>, vector<1x1xbf16>
    %109 = arith.truncf %106 : vector<5x128xf32> to vector<5x128xbf16>
    %cst_30 = arith.constant dense<0.000000e+00> : vector<1x128xf32>
    %110 = tpu.matmul %107, %109, %cst_30 {dimension_numbers = #tpu.dot_dimension_numbers<[1], [0], [0], [1], [0, 0, 1, 1], [], []>} : vector<1x5xbf16>, vector<5x128xbf16>, vector<1x128xf32> -> vector<1x128xf32>
    %111 = arith.extf %108 : vector<1x1xbf16> to vector<1x1xf32>
    %112 = vector.broadcast %111 : vector<1x1xf32> to vector<1x128xf32>
    %113 = arith.addf %110, %112 : vector<1x128xf32>
    %c0_31 = arith.constant 0 : index
    %c0_32 = arith.constant 0 : index
    %114 = vector.load %arg3[%c0_31, %c0_32] : memref<9x128xf32, #tpu.memory_space<vmem>>, vector<8x128xf32>
    tpu.vector_store %arg3[%c0_31, %c0_32], %45 {strides = array<i32>} : memref<9x128xf32, #tpu.memory_space<vmem>>, vector<8x128xf32>,
    %c8 = arith.constant 8 : index
    %c0_33 = arith.constant 0 : index
    %115 = vector.load %arg3[%c8, %c0_33] : memref<9x128xf32, #tpu.memory_space<vmem>>, vector<1x128xf32>
    tpu.vector_store %arg3[%c8, %c0_33], %113 {strides = array<i32>} : memref<9x128xf32, #tpu.memory_space<vmem>>, vector<1x128xf32>,
    return
  }
  func.func @transform_0(%arg0: i32) -> (i32, i32) {
    %c0_i32 = arith.constant 0 : i32
    %c0_i32_0 = arith.constant 0 : i32
    return %c0_i32, %arg0 : i32, i32
  }
  func.func @transform_1(%arg0: i32) -> (i32, i32) {
    %c0_i32 = arith.constant 0 : i32
    %c0_i32_0 = arith.constant 0 : i32
    %c0_i32_1 = arith.constant 0 : i32
    return %c0_i32, %c0_i32_0 : i32, i32
  }
  func.func @transform_2(%arg0: i32) -> (i32, i32) {
    %c0_i32 = arith.constant 0 : i32
    %c0_i32_0 = arith.constant 0 : i32
    return %c0_i32, %arg0 : i32, i32
  }
}

</mosaic_0001>

<llo_original>
// kernel: tpu_custom_call.1
$region0: #{tpu_custom_call.1}
  #allocation0 [shape = 'u32[]', space=smem, size = 0x4, offset = 0x4, fixed_abs, tag = 'smem constant byte address 0x4 - core index']
  #allocation1 [shape = 'u32[72,128]{1,0:T(1,128)}', space=vmem, size = 0x9000, scoped, tag = 'internal scratch']
  %s0 = inlined_call_operand.vmem [shape: f32[6,128], index: 0, kind: input, shape index: {}]
  %s1 = inlined_call_operand.vmem [shape: bf16[160,32], index: 1, kind: input, shape index: {}]
  %s2 = inlined_call_operand.hbm [shape: f32[9,128], index: 2, kind: output, shape index: {}]
  %s3 = sld [smem:[#allocation0]]
  $region18: #{tpu_custom_call.1} parent=0
    _
  %s5 = ssub.s32 1, %s3
  %s6 = scalar_select 0, %s5, %s3
  $region1: #{tpu_custom_call.1} parent=0
    #allocation2 [shape = 'u8[8192]{0}', space=vmem, size = 0x2000, scoped, tag = 'output window, operand 0, single buffered']
    #allocation3 [shape = 's32[1]{0}', space=sflag, size = 0x4, scoped, tag = 'scoped memory for tpu_custom_call.1']
    %7 = vsyncpa [#allocation3], 0
    // Predicated region
    $region2: #{tpu_custom_call.1} parent=1 // pred_check
      _
    $region3: #{tpu_custom_call.1} parent=1 // pred_check_branch
      %9 = sbr.rel (0) target = $region5
    $region4: #{tpu_custom_call.1} parent=1 // pred_region
      _
    $region5: #{tpu_custom_call.1} parent=1 // pred_fallthru
      _
    // Predicated region
    $region6: #{tpu_custom_call.1} parent=1 // pred_check
      _
    $region7: #{tpu_custom_call.1} parent=1 // pred_check_branch
      %11 = sbr.rel (0) target = $region9
    $region8: #{tpu_custom_call.1} parent=1 // pred_region
      _
    $region9: #{tpu_custom_call.1} parent=1 // pred_fallthru
      _
    %v13 = vld [vmem:[%s0] sm:$0x3f]
    %v14 = vld [vmem:[%s1] sm:$0xf]
    %v15 = vld [vmem:[%s1 + $0x4] sm:$0xf]
    %v16 = vld [vmem:[%s1 + $0x8] sm:$0x3]
    %v17 = vunpack.c.l.bf16 %v14
    %v18 = vunpack.c.l.bf16 %v15
    %v19 = vunpack.c.l.bf16 %v16
    %21 = vset.pattern.permute.xlu0 0
    %22 = vperm.xlu0 %21, %v17
    %v23 = vpop.permute.xlu0 %22
    %26 = vset.pattern.permute.xlu0 0
    %27 = vperm.xlu0 %26, %v18
    %v28 = vpop.permute.xlu0 %27
    %31 = vset.pattern.permute.xlu0 0
    %32 = vperm.xlu0 %31, %v19
    %v33 = vpop.permute.xlu0 %32
    %v35 = vperm.slane %v13, 0
    %v36 = vmul.f32 %v23, %v35
    %v37 = vmul.f32 %v28, %v35
    %v38 = vmul.f32 %v33, %v35
    %39 = vset.pattern.permute.xlu0 1
    %40 = vperm.xlu0 %39, %v17
    %v41 = vpop.permute.xlu0 %40
    %43 = vset.pattern.permute.xlu0 1
    %44 = vperm.xlu0 %43, %v18
    %v45 = vpop.permute.xlu0 %44
    %47 = vset.pattern.permute.xlu0 1
    %48 = vperm.xlu0 %47, %v19
    %v49 = vpop.permute.xlu0 %48
    %v51 = vperm.slane %v13, 1
    %v52 = vmul.f32 %v41, %v51
    %v53 = vmul.f32 %v45, %v51
    %v54 = vmul.f32 %v49, %v51
    %v55 = vadd.f32 %v36, %v52
    %v56 = vadd.f32 %v37, %v53
    %v57 = vadd.f32 %v38, %v54
    %58 = vset.pattern.permute.xlu0 2
    %59 = vperm.xlu0 %58, %v17
    %v60 = vpop.permute.xlu0 %59
    %62 = vset.pattern.permute.xlu0 2
    %63 = vperm.xlu0 %62, %v18
    %v64 = vpop.permute.xlu0 %63
    %66 = vset.pattern.permute.xlu0 2
    %67 = vperm.xlu0 %66, %v19
    %v68 = vpop.permute.xlu0 %67
    %v70 = vadd.f32 %v55, %v60
    %v71 = vadd.f32 %v56, %v64
    %v72 = vadd.f32 %v57, %v68
    %v73 = vmax.f32 %v70, 0.0
    %v74 = vmax.f32 %v71, 0.0
    %v75 = vmax.f32 %v72, 0.0
    %v76 = vld [vmem:[%s1 + $0x10] sm:$0xf]
    %v77 = vld [vmem:[%s1 + $0x14] sm:$0xf]
    %v78 = vld [vmem:[%s1 + $0x18] sm:$0xf]
    %v79 = vpack.c.bf16 %v74, %v73
    %v80 = vpack.c.bf16 %v75, %v75
    %v81 = vunpack.c.l.bf16 %v76
    %v82 = vunpack.c.l.bf16 %v77
    %v83 = vunpack.c.l.bf16 %v78
    %85 = vset.pattern.permute.xlu0 20
    %86 = vperm.xlu0 %85, %v81
    %v87 = vpop.permute.xlu0 %86
    %90 = vset.pattern.permute.xlu0 20
    %91 = vperm.xlu0 %90, %v82
    %v92 = vpop.permute.xlu0 %91
    %95 = vset.pattern.permute.xlu0 20
    %96 = vperm.xlu0 %95, %v83
    %v97 = vpop.permute.xlu0 %96
    %v102 = vunpack.c.l.b16 %v76
    %v103 = vunpack.c.l.b16 %v77
    %v104 = vunpack.c.l.b16 %v78
    %v105 = vpack.c.b16 %v103, %v102
    %v106 = vpack.c.b16 %v104, %v104
    %vm107 = vcmask 162816
    %v109 = vsel %vm107, %v105, 0
    %v112 = vsel %vm107, %v106, 0
    %vm114 = vcmask 1041408
    %v116 = vsel %vm114, %v80, 0
    %118 = vmatpush.bf16.msra.mxu0 0
    %119 = vmatpush.bf16.msra.mxu0 0
    %120 = vmatpush.bf16.msra.mxu0 0
    %121 = vmatpush.bf16.msra.mxu0 0
    %122 = vmatpush.bf16.msra.mxu0 0
    %123 = vmatpush.bf16.msra.mxu0 0
    %124 = vmatpush.bf16.msra.mxu0 %v116
    %125 = vmatpush.bf16.msra.mxu0 %v79
    %126 = vmatmul.bf16.gmra.mxu0 %v109
    %v127 = vpop.f32.mrf.mxu0
    %v128 = vadd.f32 %v87, %v127
    %v129 = vpop.f32.mrf.mxu0
    %v130 = vadd.f32 %v92, %v129
    %131 = vmatmul.bf16.gmra.mxu0 %v112
    %v132 = vpop.f32.mrf.mxu0
    %v133 = vadd.f32 %v97, %v132
    %v134 = vpop.f32.mrf.mxu0
    %135 = vdwg.mxu0
    %v136 = vmax.f32 %v128, 0.0
    %v137 = vmax.f32 %v130, 0.0
    %v138 = vmax.f32 %v133, 0.0
    %v139 = vld [vmem:[%s1 + $0x20] sm:$0xf]
    %v140 = vld [vmem:[%s1 + $0x24] sm:$0x7]
    %v141 = vpack.c.bf16 %v137, %v136
    %v142 = vpack.c.bf16 %v138, %v138
    %v143 = vunpack.c.l.bf16 %v139
    %v144 = vunpack.c.l.bf16 %v140
    %146 = vset.pattern.permute.xlu0 24
    %147 = vperm.xlu0 %146, %v143
    %v148 = vpop.permute.xlu0 %147
    %151 = vset.pattern.permute.xlu0 24
    %152 = vperm.xlu0 %151, %v144
    %v153 = vpop.permute.xlu0 %152
    %v157 = vunpack.c.l.b16 %v139
    %v158 = vunpack.c.l.b16 %v140
    %v159 = vpack.c.b16 %v158, %v157
    %vm160 = vcmask 195584
    %v162 = vsel %vm160, %v159, 0
    %vm164 = vcmask 1043456
    %v166 = vsel %vm164, %v142, 0
    %168 = vmatpush.bf16.msra.mxu0 0
    %169 = vmatpush.bf16.msra.mxu0 0
    %170 = vmatpush.bf16.msra.mxu0 0
    %171 = vmatpush.bf16.msra.mxu0 0
    %172 = vmatpush.bf16.msra.mxu0 0
    %173 = vmatpush.bf16.msra.mxu0 0
    %174 = vmatpush.bf16.msra.mxu0 %v166
    %175 = vmatpush.bf16.msra.mxu0 %v141
    %176 = vmatmul.bf16.gmra.mxu0 %v162
    %v177 = vpop.f32.mrf.mxu0
    %v178 = vadd.f32 %v148, %v177
    %v179 = vpop.f32.mrf.mxu0
    %v180 = vadd.f32 %v153, %v179
    %181 = vdwg.mxu0
    %v182 = vmax.f32 %v178, 0.0
    %v183 = vmax.f32 %v180, 0.0
    %v184 = vld [vmem:[%s1 + $0x28] sm:$0xf]
    %v185 = vpack.c.bf16 %v183, %v182
    %v186 = vunpack.c.l.bf16 %v184
    %188 = vset.pattern.permute.xlu0 14
    %189 = vperm.xlu0 %188, %v186
    %v190 = vpop.permute.xlu0 %189
    %vm192 = vcmask 113664
    %v194 = vsel %vm192, %v184, 0
    %vm196 = vcmask 1046528
    %v198 = vsel %vm196, %v185, 0
    %200 = vmatpush.bf16.msra.mxu0 0
    %201 = vmatpush.bf16.msra.mxu0 0
    %202 = vmatpush.bf16.msra.mxu0 0
    %203 = vmatpush.bf16.msra.mxu0 0
    %204 = vmatpush.bf16.msra.mxu0 0
    %205 = vmatpush.bf16.msra.mxu0 0
    %206 = vmatpush.bf16.msra.mxu0 0
    %207 = vmatpush.bf16.msra.mxu0 %v198
    %208 = vmatmul.bf16.gmra.mxu0 %v194
    %v209 = vpop.f32.mrf.mxu0
    %v210 = vadd.f32 %v190, %v209
    %v211 = vpop.f32.mrf.mxu0
    %212 = vdwg.mxu0
    %v213 = vmul.f32 %v210, 0.5
    %v214 = vmul.f32 %v213, 1.442695
    %v215 = vpow.pop %v214
    %v217 = vrot.slane %v215, 2
    %v219 = vmul.f32 %v13, %v217
    %v221 = vrot.slane %v210, 6
    %v223 = vadd.f32 %v219, %v221
    %v224 = vld [vmem:[%s1 + $0x30] sm:$0xf]
    %v225 = vld [vmem:[%s1 + $0x34] sm:$0x1]
    %v226 = vunpack.c.l.bf16 %v224
    %v227 = vunpack.c.l.bf16 %v225
    %229 = vset.pattern.permute.xlu0 0
    %230 = vperm.xlu0 %229, %v226
    %v231 = vpop.permute.xlu0 %230
    %234 = vset.pattern.permute.xlu0 0
    %235 = vperm.xlu0 %234, %v227
    %v236 = vpop.permute.xlu0 %235
    %v238 = vmul.f32 %v231, %v35
    %v239 = vmul.f32 %v236, %v35
    %240 = vset.pattern.permute.xlu0 5
    %241 = vperm.xlu0 %240, %v226
    %v242 = vpop.permute.xlu0 %241
    %244 = vset.pattern.permute.xlu0 5
    %245 = vperm.xlu0 %244, %v227
    %v246 = vpop.permute.xlu0 %245
    %v248 = vadd.f32 %v238, %v242
    %v249 = vadd.f32 %v239, %v246
    %250 = vset.pattern.permute.xlu0 1
    %251 = vperm.xlu0 %250, %v226
    %v252 = vpop.permute.xlu0 %251
    %254 = vset.pattern.permute.xlu0 1
    %255 = vperm.xlu0 %254, %v227
    %v256 = vpop.permute.xlu0 %255
    %v258 = vperm.slane %v223, 2
    %v259 = vmul.f32 %v252, %v258
    %v260 = vmul.f32 %v256, %v258
    %v261 = vadd.f32 %v248, %v259
    %v262 = vadd.f32 %v249, %v260
    %263 = vset.pattern.permute.xlu0 2
    %264 = vperm.xlu0 %263, %v226
    %v265 = vpop.permute.xlu0 %264
    %267 = vset.pattern.permute.xlu0 2
    %268 = vperm.xlu0 %267, %v227
    %v269 = vpop.permute.xlu0 %268
    %v271 = vperm.slane %v223, 3
    %v272 = vmul.f32 %v265, %v271
    %v273 = vmul.f32 %v269, %v271
    %v274 = vadd.f32 %v261, %v272
    %v275 = vadd.f32 %v262, %v273
    %276 = vset.pattern.permute.xlu0 3
    %277 = vperm.xlu0 %276, %v226
    %v278 = vpop.permute.xlu0 %277
    %280 = vset.pattern.permute.xlu0 3
    %281 = vperm.xlu0 %280, %v227
    %v282 = vpop.permute.xlu0 %281
    %v284 = vperm.slane %v223, 4
    %v285 = vmul.f32 %v278, %v284
    %v286 = vmul.f32 %v282, %v284
    %v287 = vadd.f32 %v274, %v285
    %v288 = vadd.f32 %v275, %v286
    %289 = vset.pattern.permute.xlu0 4
    %290 = vperm.xlu0 %289, %v226
    %v291 = vpop.permute.xlu0 %290
    %293 = vset.pattern.permute.xlu0 4
    %294 = vperm.xlu0 %293, %v227
    %v295 = vpop.permute.xlu0 %294
    %v297 = vperm.slane %v223, 5
    %v298 = vmul.f32 %v291, %v297
    %v299 = vmul.f32 %v295, %v297
    %v300 = vadd.f32 %v287, %v298
    %v301 = vadd.f32 %v288, %v299
    %v302 = vmax.f32 %v300, 0.0
    %v303 = vmax.f32 %v301, 0.0
    %v304 = vld [vmem:[%s1 + $0x38] sm:$0xf]
    %v305 = vpack.c.bf16 %v303, %v302
    %v306 = vunpack.c.l.bf16 %v304
    %308 = vset.pattern.permute.xlu0 10
    %309 = vperm.xlu0 %308, %v306
    %v310 = vpop.permute.xlu0 %309
    %vm312 = vcmask 80896
    %v314 = vsel %vm312, %v304, 0
    %vm316 = vcmask 1044480
    %v318 = vsel %vm316, %v305, 0
    %320 = vmatpush.bf16.msra.mxu0 0
    %321 = vmatpush.bf16.msra.mxu0 0
    %322 = vmatpush.bf16.msra.mxu0 0
    %323 = vmatpush.bf16.msra.mxu0 0
    %324 = vmatpush.bf16.msra.mxu0 0
    %325 = vmatpush.bf16.msra.mxu0 0
    %326 = vmatpush.bf16.msra.mxu0 0
    %327 = vmatpush.bf16.msra.mxu0 %v318
    %328 = vmatmul.bf16.gmra.mxu0 %v314
    %v329 = vpop.f32.mrf.mxu0
    %v330 = vadd.f32 %v310, %v329
    %v331 = vpop.f32.mrf.mxu0
    %332 = vdwg.mxu0
    %v333 = vmax.f32 %v330, 0.0
    %v334 = vld [vmem:[%s1 + $0x40] sm:$0x7]
    %v335 = vpack.c.bf16 %v333, %v333
    %v336 = vunpack.c.l.bf16 %v334
    %338 = vset.pattern.permute.xlu0 7
    %339 = vperm.xlu0 %338, %v336
    %v340 = vpop.permute.xlu0 %339
    %vm342 = vcmask 56320
    %v344 = vsel %vm342, %v334, 0
    %vm346 = vcmask 1042432
    %v347 = vsel %vm346, 4294967295, 65535
    %v348 = vsel %vm164, %v347, 0
    %v350 = vand.u32 %v335, %v348
    %352 = vmatpush.bf16.msra.mxu0 0
    %353 = vmatpush.bf16.msra.mxu0 0
    %354 = vmatpush.bf16.msra.mxu0 0
    %355 = vmatpush.bf16.msra.mxu0 0
    %356 = vmatpush.bf16.msra.mxu0 0
    %357 = vmatpush.bf16.msra.mxu0 0
    %358 = vmatpush.bf16.msra.mxu0 0
    %359 = vmatpush.bf16.msra.mxu0 %v350
    %360 = vmatmul.bf16.gmra.mxu0 %v344
    %v361 = vpop.f32.mrf.mxu0
    %v362 = vadd.f32 %v340, %v361
    %v363 = vpop.f32.mrf.mxu0
    %364 = vdwg.mxu0
    %v365 = vmax.f32 %v362, 0.0
    %v366 = vld [vmem:[%s1 + $0x48] sm:$0x1]
    %v367 = vpack.c.bf16 %v365, %v365
    %v368 = vunpack.c.l.bf16 %v366
    %370 = vset.pattern.permute.xlu0 5
    %371 = vperm.xlu0 %370, %v368
    %v372 = vpop.permute.xlu0 %371
    %vm374 = vcmask 39936
    %v376 = vsel %vm374, %v366, 0
    %v378 = vsel %vm114, 4294967295, 65535
    %v379 = vsel %vm346, %v378, 0
    %v381 = vand.u32 %v367, %v379
    %383 = vmatpush.bf16.msra.mxu0 0
    %384 = vmatpush.bf16.msra.mxu0 0
    %385 = vmatpush.bf16.msra.mxu0 0
    %386 = vmatpush.bf16.msra.mxu0 0
    %387 = vmatpush.bf16.msra.mxu0 0
    %388 = vmatpush.bf16.msra.mxu0 0
    %389 = vmatpush.bf16.msra.mxu0 0
    %390 = vmatpush.bf16.msra.mxu0 %v381
    %391 = vmatmul.bf16.gmra.mxu0 %v376
    %v392 = vpop.f32.mrf.mxu0
    %v393 = vadd.f32 %v372, %v392
    %v394 = vpop.f32.mrf.mxu0
    %395 = vdwg.mxu0
    %396 = vst [vmem:[#allocation2] sm:$0xff] %v210
    %397 = vst [vmem:[#allocation2 + $0x8] sm:$0x1] %v393
    // Predicated region
    $region10: #{tpu_custom_call.1} parent=1 // pred_check
      _
    $region11: #{tpu_custom_call.1} parent=1 // pred_check_branch
      %399 = sbr.rel (0) target = $region13
    $region12: #{tpu_custom_call.1} parent=1 // pred_region
      %401 = vsyncadd [#allocation3], 0
      %s402 = sshll.u32 [#allocation2], 4
      %s403 = int_to_ptr.vmem [resolvable:$true] %s402
      %s404 = sshll.u32 %s2, 4
      %s405 = int_to_ptr.hbm [resolvable:$true] %s404
      %410 = dma.vmem_to_hbm [thread:$0]  %s403, 256, %s405, [#allocation3], 128, 128, 8
    $region13: #{tpu_custom_call.1} parent=1 // pred_fallthru
      _
    // Predicated region
    $region14: #{tpu_custom_call.1} parent=1 // pred_check
      _
    $region15: #{tpu_custom_call.1} parent=1 // pred_check_branch
      %412 = sbr.rel (0) target = $region17
    $region16: #{tpu_custom_call.1} parent=1 // pred_region
      %414 = dma.done [#allocation3], 256
    $region17: #{tpu_custom_call.1} parent=1 // pred_fallthru
      _
    %415 = vsyncpa [#allocation3], 1

</llo_original>
